<compile_context>
chip_gen: v7x
topology: tpu7x:2x2x1
jax: 0.10.0
libtpu: 0.0.40
codegen_flags: <defaults>
</compile_context>

<pallas_src>
import math
import functools

import jax
import jax.numpy as jnp
from jax.experimental import pallas as pl
from jax.experimental.pallas import tpu as pltpu


# ----------------------------------------------------------------------------- #
# Positional table (exact port of _get_positional_encoding)
# ----------------------------------------------------------------------------- #
def _sinusoidal_table(max_length: int, embed_size: int) -> jnp.ndarray:
    """Returns (1, max_length, embed_size) float32, identical to the torch buffer."""
    position = jnp.arange(0, max_length, dtype=jnp.float32)[:, None]            # (L, 1)
    div_term = jnp.exp(
        jnp.arange(0, embed_size, 2, dtype=jnp.float32) * (-math.log(10000.0) / embed_size)
    )                                                                            # (E/2,)
    pe = jnp.zeros((max_length, embed_size), dtype=jnp.float32)
    pe = pe.at[:, 0::2].set(jnp.sin(position * div_term))
    pe = pe.at[:, 1::2].set(jnp.cos(position * div_term))
    return pe[None]                                                              # (1, L, E)


# ----------------------------------------------------------------------------- #
# Kernel: gather(emb, ids) + pos-emb -> LayerNorm(eps=1e-12) over (TS, E) rows
# ----------------------------------------------------------------------------- #
def _embed_pos_ln_kernel(ids_ref, emb_ref, pe_ref, gamma_ref, beta_ref, out_ref):
    # ids_ref : (1, TS, 1) int32   token ids for this (batch, position-tile) block
    # emb_ref : (V, E)             full embedding table (VMEM resident)
    # pe_ref  : (TS, E)            positional rows for this position tile
    # gamma/beta : (1, E)          LayerNorm affine params
    # out_ref : (1, TS, E)
    idx = ids_ref[0]                                    # (TS, 1) int32, ids along sublanes
    ts = idx.shape[0]
    vocab = emb_ref.shape[0]

    emb = emb_ref[...]                                  # (V, E), stays in VMEM across steps
    one_hot = (idx == jax.lax.broadcasted_iota(jnp.int32, (ts, vocab), 1)).astype(emb.dtype)
    # Exact row gather on the MXU: only 0/1 coefficients, so the result is the
    # gathered rows bit-exactly (HIGHEST precision keeps f32 tables exact too).
    we = jnp.dot(one_hot, emb,
                 preferred_element_type=jnp.float32,
                 precision=jax.lax.Precision.HIGHEST)   # (TS, E) f32

    x = we + pe_ref[...]                                # fused positional add
    mean = jnp.mean(x, axis=-1, keepdims=True)          # (TS, 1)  XLU reduce
    xc = x - mean
    var = jnp.mean(xc * xc, axis=-1, keepdims=True)     # two-pass variance (ref parity)
    inv = jax.lax.rsqrt(var + 1e-12)                    # EUP rsqrt
    y = xc * inv * gamma_ref[...] + beta_ref[...]
    out_ref[0] = y.astype(out_ref.dtype)


# ----------------------------------------------------------------------------- #
# Tiling helpers
# ----------------------------------------------------------------------------- #
def _pick_tile_positions(seq: int, embed: int, *, cap: int = 512,
                         tile_budget_bytes: int = 12 << 20) -> int:
    """Largest TS that divides seq, is a multiple of 128 (lane/sublane legal & lane-dense),
    and keeps the double-buffered (TS, E) f32 pe + out tiles within the budget
    (sized conservatively for v7x's smaller VMEM)."""
    if seq % 128 != 0:
        # Small / ragged seq: full-extent blocks are always layout-legal.
        return seq
    budget_ts = max(128, ((tile_budget_bytes // (16 * embed)) // 128) * 128)
    ts = 128
    for cand in range(128, min(seq, cap, budget_ts) + 1, 128):
        if seq % cand == 0:
            ts = cand
    return ts


# ----------------------------------------------------------------------------- #
# Forward wrapper
# ----------------------------------------------------------------------------- #
@functools.partial(jax.jit, static_argnames=("ts",))
def sinusoidal_embedding_forward(ids, emb_table, pe_table, gamma, beta, *, ts=None):
    """ids: (B, S) int token ids. emb_table: (V, E). pe_table: (L, E).
    gamma/beta: (E,). Returns (B, S, E) float32.  Requires B == S (torch quirk:
    the module slices the positional table with x.size(-2) == B and broadcasts)."""
    B, S = ids.shape
    V, E = emb_table.shape
    if B != S:
        raise ValueError(
            f"SinusoidalEmbeddingLayer forward broadcasts a (1, B, E) positional slice "
            f"against (B, S, E); this only works when B == S (got B={B}, S={S}).")
    if B > pe_table.shape[0]:
        raise ValueError(f"x.size(-2)={B} exceeds max_length={pe_table.shape[0]}.")

    if ts is None:
        ts = _pick_tile_positions(S, E)
    assert S % ts == 0 and (ts % 128 == 0 or ts == S), f"bad tile size ts={ts} for S={S}"

    # Tiny int32 reshape so token ids arrive as a (TS, 1) sublane column per block.
    ids_col = ids.astype(jnp.int32).reshape(B, S, 1)
    # Un-broadcast positional rows (torch slices with x.size(-2) == B == S here).
    pos = pe_table[:B].astype(jnp.float32)                      # (S, E)
    gamma2 = gamma.reshape(1, E).astype(jnp.float32)
    beta2 = beta.reshape(1, E).astype(jnp.float32)

    # Right-size the VMEM request: double buffers for streamed blocks + resident table.
    vmem_bytes = 4 * (2 * ts * E          # pe blocks
                      + 2 * ts * E        # out blocks
                      + 2 * V * E         # embedding table (conservatively x2)
                      + 2 * ts            # ids column blocks
                      + 4 * E)            # gamma + beta
    vmem_limit = int(min(32 << 20, max(vmem_bytes + (4 << 20), 8 << 20)))

    # Grid: position tiles outer, batch inner -> pe/emb/gamma/beta blocks keep the
    # same block index across the inner axis and are only DMA'd when j changes.
    out = pl.pallas_call(
        _embed_pos_ln_kernel,
        out_shape=jax.ShapeDtypeStruct((B, S, E), jnp.float32),
        grid=(S // ts, B),
        in_specs=[
            pl.BlockSpec((1, ts, 1), lambda j, b: (b, j, 0)),   # token ids (column layout)
            pl.BlockSpec((V, E), lambda j, b: (0, 0)),          # full embedding table
            pl.BlockSpec((ts, E), lambda j, b: (j, 0)),         # positional rows for tile j
            pl.BlockSpec((1, E), lambda j, b: (0, 0)),          # LayerNorm gamma
            pl.BlockSpec((1, E), lambda j, b: (0, 0)),          # LayerNorm beta
        ],
        out_specs=pl.BlockSpec((1, ts, E), lambda j, b: (b, j, 0)),
        compiler_params=pltpu.CompilerParams(
            dimension_semantics=("parallel", "parallel"),       # megacore-shardable on v7x
            vmem_limit_bytes=vmem_limit,
        ),
    )(ids_col, emb_table, pos, gamma2, beta2)
    return out


# ----------------------------------------------------------------------------- #
# Pure-JAX reference (exact port of the PyTorch forward)
# ----------------------------------------------------------------------------- #
def reference_forward(ids, emb_table, pe_full, gamma, beta):
    we = emb_table[ids]                                   # (B, S, E)
    pos = pe_full[:, : ids.shape[-2], :]                  # exact x.size(-2) slice
    x = we + pos
    mean = jnp.mean(x, axis=-1, keepdims=True)
    var = jnp.mean((x - mean) ** 2, axis=-1, keepdims=True)
    return (x - mean) / jnp.sqrt(var + 1e-12) * gamma + beta


if __name__ == "__main__":
    vocab_size = 64
    embed_size = 128       # multiple of 128 -> lane-dense, unmasked stores
    max_length = 16
    batch = 12
    seq = 12               # B == S so the torch x.size(-2) slice broadcasts

    key = jax.random.PRNGKey(0)
    k_ids, k_emb, k_g, k_b = jax.random.split(key, 4)

    ids = jax.random.randint(k_ids, (batch, seq), 0, vocab_size, dtype=jnp.int32)
    emb_table = jax.random.normal(k_emb, (vocab_size, embed_size), dtype=jnp.float32)
    pe_full = _sinusoidal_table(max_length, embed_size)                   # (1, L, E)
    gamma = 1.0 + 0.1 * jax.random.normal(k_g, (embed_size,), dtype=jnp.float32)
    beta = 0.1 * jax.random.normal(k_b, (embed_size,), dtype=jnp.float32)

    out = sinusoidal_embedding_forward(ids, emb_table, pe_full[0], gamma, beta)
    jax.block_until_ready(out)

    ref = reference_forward(ids, emb_table, pe_full, gamma, beta)
    assert out.shape == ref.shape == (batch, seq, embed_size)
    max_err = float(jnp.max(jnp.abs(out - ref)))
    assert jnp.allclose(out, ref, atol=3e-5, rtol=3e-5), f"max abs err {max_err}"
    print("KERNEL_OK")
</pallas_src>

<mosaic_0001>
module attributes {stable_mosaic.version = 11 : i64} {
  func.func @_embed_pos_ln_kernel(%arg0: i32, %arg1: i32, %arg2: memref<1x12x1xi32, #tpu.memory_space<vmem>>, %arg3: memref<64x128xf32, #tpu.memory_space<vmem>>, %arg4: memref<12x128xf32, #tpu.memory_space<vmem>>, %arg5: memref<1x128xf32, #tpu.memory_space<vmem>>, %arg6: memref<1x128xf32, #tpu.memory_space<vmem>>, %arg7: memref<1x12x128xf32, #tpu.memory_space<vmem>>) attributes {dimension_semantics = [#tpu.dimension_semantics<parallel>, #tpu.dimension_semantics<parallel>], iteration_bounds = array<i64: 1, 12>, scalar_prefetch = 0 : i64, scratch_operands = 0 : i64, tpu.core_type = #tpu.core_type<tc>, window_params = [{transform_indices = @transform_0, window_bounds = array<i64: 1, 12, 1>}, {pipeline_mode = #tpu.pipeline_mode<synchronous>, transform_indices = @transform_1, window_bounds = array<i64: 64, 128>}, {transform_indices = @transform_2, window_bounds = array<i64: 12, 128>}, {pipeline_mode = #tpu.pipeline_mode<synchronous>, transform_indices = @transform_3, window_bounds = array<i64: 1, 128>}, {pipeline_mode = #tpu.pipeline_mode<synchronous>, transform_indices = @transform_4, window_bounds = array<i64: 1, 128>}, {transform_indices = @transform_5, window_bounds = array<i64: 1, 12, 128>}]} {
    %c0 = arith.constant 0 : index
    %c0_0 = arith.constant 0 : index
    %c0_1 = arith.constant 0 : index
    %0 = vector.load %arg2[%c0, %c0_0, %c0_1] : memref<1x12x1xi32, #tpu.memory_space<vmem>>, vector<1x12x1xi32>
    %1 = vector.shape_cast %0 : vector<1x12x1xi32> to vector<12x1xi32>
    %c0_2 = arith.constant 0 : index
    %c0_3 = arith.constant 0 : index
    %2 = vector.load %arg3[%c0_2, %c0_3] : memref<64x128xf32, #tpu.memory_space<vmem>>, vector<64x128xf32>
    %3 = tpu.iota {dimensions = array<i32: 1>} : vector<12x64xi32>
    %4 = vector.broadcast %1 : vector<12x1xi32> to vector<12x64xi32>
    %5 = arith.cmpi eq, %4, %3 : vector<12x64xi32>
    %6 = arith.extui %5 : vector<12x64xi1> to vector<12x64xi32>
    %7 = arith.sitofp %6 : vector<12x64xi32> to vector<12x64xf32>
    %cst = arith.constant dense<0.000000e+00> : vector<12x128xf32>
    %8 = tpu.matmul %7, %2, %cst {dimension_numbers = #tpu.dot_dimension_numbers<[1], [0], [0], [1], [0, 0, 1, 1], [], []>, precision = #tpu.contract_precision<fp32>} : vector<12x64xf32>, vector<64x128xf32>, vector<12x128xf32> -> vector<12x128xf32>
    %c0_4 = arith.constant 0 : index
    %c0_5 = arith.constant 0 : index
    %9 = vector.load %arg4[%c0_4, %c0_5] : memref<12x128xf32, #tpu.memory_space<vmem>>, vector<12x128xf32>
    %10 = arith.addf %8, %9 : vector<12x128xf32>
    %cst_6 = arith.constant dense<0.000000e+00> : vector<12xf32>
    %11 = vector.multi_reduction <add>, %10, %cst_6 [1] : vector<12x128xf32> to vector<12xf32>
    %12 = vector.shape_cast %11 : vector<12xf32> to vector<12x1xf32>
    %cst_7 = arith.constant 1.280000e+02 : f32
    %13 = vector.broadcast %cst_7 : f32 to vector<12x1xf32>
    %14 = arith.divf %12, %13 : vector<12x1xf32>
    %15 = vector.broadcast %14 : vector<12x1xf32> to vector<12x128xf32>
    %16 = arith.subf %10, %15 : vector<12x128xf32>
    %17 = arith.mulf %16, %16 : vector<12x128xf32>
    %cst_8 = arith.constant dense<0.000000e+00> : vector<12xf32>
    %18 = vector.multi_reduction <add>, %17, %cst_8 [1] : vector<12x128xf32> to vector<12xf32>
    %19 = vector.shape_cast %18 : vector<12xf32> to vector<12x1xf32>
    %cst_9 = arith.constant 1.280000e+02 : f32
    %20 = vector.broadcast %cst_9 : f32 to vector<12x1xf32>
    %21 = arith.divf %19, %20 : vector<12x1xf32>
    %cst_10 = arith.constant 9.99999996E-13 : f32
    %22 = vector.broadcast %cst_10 : f32 to vector<12x1xf32>
    %23 = arith.addf %21, %22 : vector<12x1xf32>
    %24 = math.rsqrt %23 : vector<12x1xf32>
    %25 = vector.broadcast %24 : vector<12x1xf32> to vector<12x128xf32>
    %26 = arith.mulf %16, %25 : vector<12x128xf32>
    %c0_11 = arith.constant 0 : index
    %c0_12 = arith.constant 0 : index
    %27 = vector.load %arg5[%c0_11, %c0_12] : memref<1x128xf32, #tpu.memory_space<vmem>>, vector<1x128xf32>
    %28 = vector.broadcast %27 : vector<1x128xf32> to vector<12x128xf32>
    %29 = arith.mulf %26, %28 : vector<12x128xf32>
    %c0_13 = arith.constant 0 : index
    %c0_14 = arith.constant 0 : index
    %30 = vector.load %arg6[%c0_13, %c0_14] : memref<1x128xf32, #tpu.memory_space<vmem>>, vector<1x128xf32>
    %31 = vector.broadcast %30 : vector<1x128xf32> to vector<12x128xf32>
    %32 = arith.addf %29, %31 : vector<12x128xf32>
    %c0_15 = arith.constant 0 : index
    %c0_16 = arith.constant 0 : index
    %c0_17 = arith.constant 0 : index
    %33 = vector.load %arg7[%c0_15, %c0_16, %c0_17] : memref<1x12x128xf32, #tpu.memory_space<vmem>>, vector<1x12x128xf32>
    %34 = vector.shape_cast %33 : vector<1x12x128xf32> to vector<12x128xf32>
    %35 = vector.shape_cast %32 : vector<12x128xf32> to vector<1x12x128xf32>
    tpu.vector_store %arg7[%c0_15, %c0_16, %c0_17], %35 {strides = array<i32>} : memref<1x12x128xf32, #tpu.memory_space<vmem>>, vector<1x12x128xf32>,
    return
  }
  func.func @transform_0(%arg0: i32, %arg1: i32) -> (i32, i32, i32) {
    %c0_i32 = arith.constant 0 : i32
    %c0_i32_0 = arith.constant 0 : i32
    return %arg1, %arg0, %c0_i32 : i32, i32, i32
  }
  func.func @transform_1(%arg0: i32, %arg1: i32) -> (i32, i32) {
    %c0_i32 = arith.constant 0 : i32
    %c0_i32_0 = arith.constant 0 : i32
    %c0_i32_1 = arith.constant 0 : i32
    return %c0_i32, %c0_i32_0 : i32, i32
  }
  func.func @transform_2(%arg0: i32, %arg1: i32) -> (i32, i32) {
    %c0_i32 = arith.constant 0 : i32
    %c0_i32_0 = arith.constant 0 : i32
    return %arg0, %c0_i32 : i32, i32
  }
  func.func @transform_3(%arg0: i32, %arg1: i32) -> (i32, i32) {
    %c0_i32 = arith.constant 0 : i32
    %c0_i32_0 = arith.constant 0 : i32
    %c0_i32_1 = arith.constant 0 : i32
    return %c0_i32, %c0_i32_0 : i32, i32
  }
  func.func @transform_4(%arg0: i32, %arg1: i32) -> (i32, i32) {
    %c0_i32 = arith.constant 0 : i32
    %c0_i32_0 = arith.constant 0 : i32
    %c0_i32_1 = arith.constant 0 : i32
    return %c0_i32, %c0_i32_0 : i32, i32
  }
  func.func @transform_5(%arg0: i32, %arg1: i32) -> (i32, i32, i32) {
    %c0_i32 = arith.constant 0 : i32
    %c0_i32_0 = arith.constant 0 : i32
    return %arg1, %arg0, %c0_i32 : i32, i32, i32
  }
}

</mosaic_0001>

<llo_original>
// kernel: sinusoidal_embedding_forward.1
$region0: #{sinusoidal_embedding_forward.1}
  #allocation0 [shape = 'u32[]', space=smem, size = 0x4, offset = 0x4, fixed_abs, tag = 'smem constant byte address 0x4 - core index']
  #allocation1 [shape = 'u32[144,128]{1,0:T(1,128)}', space=vmem, size = 0x12000, scoped, tag = 'internal scratch']
  %s0 = inlined_call_operand.vmem [shape: s32[12,12,1], index: 0, kind: input, shape index: {}]
  %s1 = inlined_call_operand.vmem [shape: f32[64,128], index: 1, kind: input, shape index: {}]
  %s2 = inlined_call_operand.vmem [shape: f32[12,128], index: 2, kind: input, shape index: {}]
  %s3 = inlined_call_operand.vmem [shape: f32[1,128], index: 3, kind: input, shape index: {}]
  %s4 = inlined_call_operand.vmem [shape: f32[1,128], index: 4, kind: input, shape index: {}]
  %s5 = inlined_call_operand.hbm [shape: f32[12,12,128], index: 5, kind: output, shape index: {}]
  %s6 = sld [smem:[#allocation0]]
  $region53: #{sinusoidal_embedding_forward.1} parent=0
    _
  %s8 = ssub.s32 1, %s6
  %s9 = scalar_select 0, %s8, %s6
  $region1: #{sinusoidal_embedding_forward.1} parent=0
    #allocation2 [shape = 'u8[16384]{0}', space=vmem, size = 0x4000, scoped, tag = 'output window, operand 0']
    #allocation3 [shape = 's32[2]{0}', space=sflag, size = 0x8, scoped, tag = 'scoped memory for sinusoidal_embedding_forward.1']
    %10 = vsyncpa [#allocation3], 0
    %s11 = scalar_lea.sflag [#allocation3], 1
    %12 = vsyncpa %s11, 0
    loop: start=0, step=1, limit=14
    $region2: #{sinusoidal_embedding_forward.1} parent=1 // loop_pre_header
      _
    $region3: #{sinusoidal_embedding_forward.1} parent=1 // loop_header
      %s14 = sphi 0, %s18
      %p15 = scmp.ge.s32.totalorder %s14, 14
      %s21 = sphi 0, %s33
      %s22 = sphi 0, %s29
      %s23 = sphi 0, %s21
      %s24 = sphi 0, %s22
      %s25 = sphi 0, %s23
      %s26 = sphi 0, %s24
      %s38 = sphi 0, %s40
      %s41 = sphi 0, %s38
      %s42 = sphi 0, %s41
      %s58 = sphi 0, %s42
      %s62 = sphi 0, %s62
      %s64 = sphi 0, %s62
      %s65 = sphi 0, %s64
      %s79 = sphi 0, %s65
      %s85 = sphi 0, %s87
      %s88 = sphi 0, %s85
      %s89 = sphi 0, %s88
      %s105 = sphi 0, %s89
      %s109 = sphi 0, %s109
      %s111 = sphi 0, %s109
      %s112 = sphi 0, %s111
      %s126 = sphi 0, %s112
      %s130 = sphi 0, %s130
      %s132 = sphi 0, %s130
      %s133 = sphi 0, %s132
      %s147 = sphi 0, %s133
      %s155 = sphi 0, %s157
      %s158 = sphi 0, %s155
      %s159 = sphi 0, %s158
      %s175 = sphi 0, %s159
    $region4: #{sinusoidal_embedding_forward.1} parent=1 // loop_header_branch
      %17 = sbr.rel (%p15) target = $region8
    $region5: #{sinusoidal_embedding_forward.1} parent=1 // loop_body
      %s19 = ssub.s32 %s14, 1
      %s20 = ssub.s32 %s14, 2
      %s27 = sadd.s32 1, %s22
      %p28 = scmp.ge.s32.totalorder %s27, 12
      %s29 = scalar_select %p28, 0, %s27
      %s30 = sadd.s32 1, %s21
      %s31 = scalar_select %p28, %s30, %s21
      %p32 = scmp.ge.s32.totalorder %s31, 1
      %s33 = scalar_select %p32, 0, %s31
      %s34 = ssub.s32 %s22, %s29
      %s35 = ssub.s32 %s21, %s33
      %s36 = sor.u32 %s34, %s35
      %p37 = scmp.eq.s32.totalorder %s36, 0
      %s39 = sadd.s32 %s38, 1
      %s40 = scalar_select %p37, %s38, %s39
      %p43 = pneg %p37
      %p44 = scmp.eq.s32.totalorder %s14, 11
      %p45 = por %p43, %p44
      %p46 = scmp.ne.s32.totalorder %s38, %s41
      %p47 = scmp.eq.s32.totalorder %s14, 0
      %p48 = por %p46, %p47
      %p49 = scmp.ne.s32.totalorder %s38, %s41
      %p50 = scmp.eq.s32.totalorder %s19, 11
      %p51 = por %p49, %p50
      %p52 = scmp.ne.s32.totalorder %s41, %s42
      %p53 = scmp.eq.s32.totalorder %s19, 0
      %p54 = por %p52, %p53
      %p55 = scmp.ne.s32.totalorder %s41, %s42
      %p56 = scmp.eq.s32.totalorder %s20, 11
      %p57 = por %p55, %p56
      %p59 = scmp.ne.s32.totalorder %s42, %s58
      %p60 = scmp.eq.s32.totalorder %s20, 0
      %p61 = por %p59, %p60
      %s63 = sadd.s32 %s62, 1
      %p66 = scmp.eq.s32.totalorder %s14, 11
      %p67 = scmp.ne.s32.totalorder %s62, %s64
      %p68 = scmp.eq.s32.totalorder %s14, 0
      %p69 = por %p67, %p68
      %p70 = scmp.ne.s32.totalorder %s62, %s64
      %p71 = scmp.eq.s32.totalorder %s19, 11
      %p72 = por %p70, %p71
      %p73 = scmp.ne.s32.totalorder %s64, %s65
      %p74 = scmp.eq.s32.totalorder %s19, 0
      %p75 = por %p73, %p74
      %p76 = scmp.ne.s32.totalorder %s64, %s65
      %p77 = scmp.eq.s32.totalorder %s20, 11
      %p78 = por %p76, %p77
      %p80 = scmp.ne.s32.totalorder %s65, %s79
      %p81 = scmp.eq.s32.totalorder %s20, 0
      %p82 = por %p80, %p81
      %s83 = ssub.s32 %s21, %s33
      %p84 = scmp.eq.s32.totalorder %s83, 0
      %s86 = sadd.s32 %s85, 1
      %s87 = scalar_select %p84, %s85, %s86
      %p90 = pneg %p84
      %p91 = scmp.eq.s32.totalorder %s14, 11
      %p92 = por %p90, %p91
      %p93 = scmp.ne.s32.totalorder %s85, %s88
      %p94 = scmp.eq.s32.totalorder %s14, 0
      %p95 = por %p93, %p94
      %p96 = scmp.ne.s32.totalorder %s85, %s88
      %p97 = scmp.eq.s32.totalorder %s19, 11
      %p98 = por %p96, %p97
      %p99 = scmp.ne.s32.totalorder %s88, %s89
      %p100 = scmp.eq.s32.totalorder %s19, 0
      %p101 = por %p99, %p100
      %p102 = scmp.ne.s32.totalorder %s88, %s89
      %p103 = scmp.eq.s32.totalorder %s20, 11
      %p104 = por %p102, %p103
      %p106 = scmp.ne.s32.totalorder %s89, %s105
      %p107 = scmp.eq.s32.totalorder %s20, 0
      %p108 = por %p106, %p107
      %s110 = sadd.s32 %s109, 1
      %p113 = scmp.eq.s32.totalorder %s14, 11
      %p114 = scmp.ne.s32.totalorder %s109, %s111
      %p115 = scmp.eq.s32.totalorder %s14, 0
      %p116 = por %p114, %p115
      %p117 = scmp.ne.s32.totalorder %s109, %s111
      %p118 = scmp.eq.s32.totalorder %s19, 11
      %p119 = por %p117, %p118
      %p120 = scmp.ne.s32.totalorder %s111, %s112
      %p121 = scmp.eq.s32.totalorder %s19, 0
      %p122 = por %p120, %p121
      %p123 = scmp.ne.s32.totalorder %s111, %s112
      %p124 = scmp.eq.s32.totalorder %s20, 11
      %p125 = por %p123, %p124
      %p127 = scmp.ne.s32.totalorder %s112, %s126
      %p128 = scmp.eq.s32.totalorder %s20, 0
      %p129 = por %p127, %p128
      %s131 = sadd.s32 %s130, 1
      %p134 = scmp.eq.s32.totalorder %s14, 11
      %p135 = scmp.ne.s32.totalorder %s130, %s132
      %p136 = scmp.eq.s32.totalorder %s14, 0
      %p137 = por %p135, %p136
      %p138 = scmp.ne.s32.totalorder %s130, %s132
      %p139 = scmp.eq.s32.totalorder %s19, 11
      %p140 = por %p138, %p139
      %p141 = scmp.ne.s32.totalorder %s132, %s133
      %p142 = scmp.eq.s32.totalorder %s19, 0
      %p143 = por %p141, %p142
      %p144 = scmp.ne.s32.totalorder %s132, %s133
      %p145 = scmp.eq.s32.totalorder %s20, 11
      %p146 = por %p144, %p145
      %p148 = scmp.ne.s32.totalorder %s133, %s147
      %p149 = scmp.eq.s32.totalorder %s20, 0
      %p150 = por %p148, %p149
      %s151 = ssub.s32 %s22, %s29
      %s152 = ssub.s32 %s21, %s33
      %s153 = sor.u32 %s151, %s152
      %p154 = scmp.eq.s32.totalorder %s153, 0
      %s156 = sadd.s32 %s155, 1
      %s157 = scalar_select %p154, %s155, %s156
      %p160 = pneg %p154
      %p161 = scmp.eq.s32.totalorder %s14, 11
      %p162 = por %p160, %p161
      %p163 = scmp.ne.s32.totalorder %s155, %s158
      %p164 = scmp.eq.s32.totalorder %s14, 0
      %p165 = por %p163, %p164
      %p166 = scmp.ne.s32.totalorder %s155, %s158
      %p167 = scmp.eq.s32.totalorder %s19, 11
      %p168 = por %p166, %p167
      %p169 = scmp.ne.s32.totalorder %s158, %s159
      %p170 = scmp.eq.s32.totalorder %s19, 0
      %p171 = por %p169, %p170
      %p172 = scmp.ne.s32.totalorder %s158, %s159
      %p173 = scmp.eq.s32.totalorder %s20, 11
      %p174 = por %p172, %p173
      %p176 = scmp.ne.s32.totalorder %s159, %s175
      %p177 = scmp.eq.s32.totalorder %s20, 0
      %p178 = por %p176, %p177
      %p179 = scmp.le.s32.totalorder 1, %s14
      %p180 = scmp.lt.s32.totalorder %s14, 13
      %p181 = pnand %p179, %p180
      %p182 = pneg %p181
      // Predicated region
      $region9: #{sinusoidal_embedding_forward.1} parent=5 // pred_check
        _
      $region10: #{sinusoidal_embedding_forward.1} parent=5 // pred_check_branch
        %184 = sbr.rel (%p181) target = $region12
      $region11: #{sinusoidal_embedding_forward.1} parent=5 // pred_region
        %s185 = ssub.s32 %s14, 1
        // Predicated region
        $region13: #{sinusoidal_embedding_forward.1} parent=11 // pred_check
          %p186 = pneg %p75
        $region14: #{sinusoidal_embedding_forward.1} parent=11 // pred_check_branch
          %188 = sbr.rel (%p186) target = $region16
        $region15: #{sinusoidal_embedding_forward.1} parent=11 // pred_region
          _
        $region16: #{sinusoidal_embedding_forward.1} parent=11 // pred_fallthru
          _
        // Predicated region
        $region17: #{sinusoidal_embedding_forward.1} parent=11 // pred_check
          %p189 = pneg %p101
        $region18: #{sinusoidal_embedding_forward.1} parent=11 // pred_check_branch
          %191 = sbr.rel (%p189) target = $region20
        $region19: #{sinusoidal_embedding_forward.1} parent=11 // pred_region
          %s192 = smul.u32 2, %s23
          %p193 = scmp.lt.s32.totalorder %s192, 1
          %s194 = scalar_select %p193, %s192, 1
          %s195 = smul.addr %s194, 8
          %s196 = scalar_lea.vmem %s2, %s195
          %s197 = smul.u32 2, %s23
        $region20: #{sinusoidal_embedding_forward.1} parent=11 // pred_fallthru
          _
        // Predicated region
        $region21: #{sinusoidal_embedding_forward.1} parent=11 // pred_check
          %p198 = pneg %p122
        $region22: #{sinusoidal_embedding_forward.1} parent=11 // pred_check_branch
          %200 = sbr.rel (%p198) target = $region24
        $region23: #{sinusoidal_embedding_forward.1} parent=11 // pred_region
          _
        $region24: #{sinusoidal_embedding_forward.1} parent=11 // pred_fallthru
          _
        // Predicated region
        $region25: #{sinusoidal_embedding_forward.1} parent=11 // pred_check
          %p201 = pneg %p143
        $region26: #{sinusoidal_embedding_forward.1} parent=11 // pred_check_branch
          %203 = sbr.rel (%p201) target = $region28
        $region27: #{sinusoidal_embedding_forward.1} parent=11 // pred_region
          _
        $region28: #{sinusoidal_embedding_forward.1} parent=11 // pred_fallthru
          _
      $region12: #{sinusoidal_embedding_forward.1} parent=5 // pred_fallthru
        _
      %p204 = scmp.lt.s32.totalorder %s14, 12
      // Predicated region
      $region29: #{sinusoidal_embedding_forward.1} parent=5 // pred_check
        %p205 = pneg %p204
      $region30: #{sinusoidal_embedding_forward.1} parent=5 // pred_check_branch
        %207 = sbr.rel (%p205) target = $region32
      $region31: #{sinusoidal_embedding_forward.1} parent=5 // pred_region
        // Predicated region
        $region33: #{sinusoidal_embedding_forward.1} parent=31 // pred_check
          %p208 = pneg %p48
        $region34: #{sinusoidal_embedding_forward.1} parent=31 // pred_check_branch
          %210 = sbr.rel (%p208) target = $region36
        $region35: #{sinusoidal_embedding_forward.1} parent=31 // pred_region
          %s211 = smul.u32 2, %s21
          %p212 = scmp.lt.s32.totalorder %s22, 11
          %s213 = scalar_select %p212, %s22, 11
          %p214 = scmp.lt.s32.totalorder %s211, 1
          %s215 = scalar_select %p214, %s211, 1
          %s216 = smul.addr %s213, 2
          %s217 = sadd.s32 %s215, %s216
          %s218 = smul.addr %s217, 8
          %s219 = scalar_lea.vmem %s0, %s218
          %s220 = smul.u32 2, %s21
        $region36: #{sinusoidal_embedding_forward.1} parent=31 // pred_fallthru
          _
      $region32: #{sinusoidal_embedding_forward.1} parent=5 // pred_fallthru
        _
      %p221 = scmp.le.s32.totalorder 1, %s14
      %p222 = scmp.lt.s32.totalorder %s14, 13
      %p223 = pnand %p221, %p222
      %p224 = pneg %p223
      // Predicated region
      $region37: #{sinusoidal_embedding_forward.1} parent=5 // pred_check
        _
      $region38: #{sinusoidal_embedding_forward.1} parent=5 // pred_check_branch
        %226 = sbr.rel (%p223) target = $region40
      $region39: #{sinusoidal_embedding_forward.1} parent=5 // pred_region
        %s227 = ssub.s32 %s14, 1
        %s228 = smul.u32 2, %s23
        %p229 = scmp.lt.s32.totalorder %s24, 11
        %s230 = scalar_select %p229, %s24, 11
        %p231 = scmp.lt.s32.totalorder %s228, 1
        %s232 = scalar_select %p231, %s228, 1
        %s233 = smul.addr %s230, 2
        %s234 = sadd.s32 %s232, %s233
        %s235 = smul.addr %s234, 8
        %s236 = scalar_lea.vmem %s0, %s235
        %p237 = pneg %p54
        %p238 = pneg %p51
        %p239 = pneg %p75
        %p240 = pneg %p72
        %s241 = smul.u32 2, %s23
        %p242 = scmp.lt.s32.totalorder %s241, 1
        %s243 = scalar_select %p242, %s241, 1
        %s244 = smul.addr %s243, 8
        %s245 = scalar_lea.vmem %s2, %s244
        %p246 = pneg %p101
        %p247 = pneg %p98
        %p248 = pneg %p122
        %p249 = pneg %p119
        %p250 = pneg %p143
        %p251 = pneg %p140
        %p252 = pneg %p171
        %p253 = pneg %p168
        %s254 = sand.u32 %s158, 1
        %s255 = scalar_lea.sflag [#allocation3], %s254
        %s256 = sand.u32 %s158, 1
        %s257 = smul.addr %s256, 16
        %s258 = scalar_lea.vmem [#allocation2], %s257
        %s259 = smul.u32 2, %s23
        %p260 = scmp.lt.s32.totalorder %s24, 11
        %s261 = scalar_select %p260, %s24, 11
        %p262 = scmp.lt.s32.totalorder %s259, 1
        %s263 = scalar_select %p262, %s259, 1
        %s264 = smul.addr %s261, 2
        %s265 = sadd.s32 %s263, %s264
        %s266 = smul.addr %s265, 8
        %s267 = scalar_lea.vmem %s0, %s266
        %s268 = smul.u32 2, %s23
        %s269 = smul.u32 2, %s23
        %p270 = scmp.lt.s32.totalorder %s269, 1
        %s271 = scalar_select %p270, %s269, 1
        %s272 = smul.addr %s271, 8
        %s273 = scalar_lea.vmem %s2, %s272
        %s274 = smul.u32 2, %s23
        %s275 = smul.u32 2, %s23
        %v276 = vld [vmem:[%s267] sm:$0xff]
        %v277 = vld [vmem:[%s267 + $0x8] sm:$0xf]
        %v278 = vld [vmem:[%s1] sm:$0xff]
        %v279 = vld [vmem:[%s1 + $0x8] sm:$0xff]
        %v280 = vld [vmem:[%s1 + $0x10] sm:$0xff]
        %v281 = vld [vmem:[%s1 + $0x18] sm:$0xff]
        %v282 = vld [vmem:[%s1 + $0x20] sm:$0xff]
        %v283 = vld [vmem:[%s1 + $0x28] sm:$0xff]
        %v284 = vld [vmem:[%s1 + $0x30] sm:$0xff]
        %v285 = vld [vmem:[%s1 + $0x38] sm:$0xff]
        %v286 = vlaneseq
        %v287 = vand.u32 %v286, 127
        %288 = vset.pattern.permute.xlu0 0
        %289 = vperm.xlu0 %288, %v276
        %v290 = vpop.permute.xlu0 %289
        %291 = vset.pattern.permute.xlu0 0
        %292 = vperm.xlu0 %291, %v277
        %v293 = vpop.permute.xlu0 %292
        %vm294 = vcmp.eq.s32.totalorder %v290, %v287
        %vm295 = vcmp.eq.s32.totalorder %v293, %v287
        %v296 = vsel %vm294, 1, 0
        %v297 = vsel %vm295, 1, 0
        %v298 = vcvt.s32.f32 %v296
        %v299 = vcvt.s32.f32 %v297
        %v300 = vld [vmem:[%s273] sm:$0xff]
        %v301 = vld [vmem:[%s273 + $0x8] sm:$0xf]
        %vm302 = vcmask 523264
        %v304 = vsel %vm302, %v298, 0
        %v307 = vsel %vm302, %v299, 0
        %309 = vmatprep.subr.mxu0 0.0
        %v310 = vand.u32 %v278, 4294901760
        %311 = vmatpush1.msra.mxu0 %v310
        %312 = vmatprep.subr.mxu0 0.0
        %v313 = vand.u32 %v279, 4294901760
        %314 = vmatpush1.msra.mxu0 %v313
        %315 = vmatprep.subr.mxu0 0.0
        %v316 = vand.u32 %v280, 4294901760
        %317 = vmatpush1.msra.mxu0 %v316
        %318 = vmatprep.subr.mxu0 0.0
        %v319 = vand.u32 %v281, 4294901760
        %320 = vmatpush1.msra.mxu0 %v319
        %321 = vmatprep.subr.mxu0 0.0
        %v322 = vand.u32 %v282, 4294901760
        %323 = vmatpush1.msra.mxu0 %v322
        %324 = vmatprep.subr.mxu0 0.0
        %v325 = vand.u32 %v283, 4294901760
        %326 = vmatpush1.msra.mxu0 %v325
        %327 = vmatprep.subr.mxu0 0.0
        %v328 = vand.u32 %v284, 4294901760
        %329 = vmatpush1.msra.mxu0 %v328
        %330 = vmatprep.subr.mxu0 0.0
        %v331 = vand.u32 %v285, 4294901760
        %332 = vmatpush1.msra.mxu0 %v331
        %333 = vmatprep.subr.mxu0 0.0
        %334 = vmatpush1.msra.mxu0 0.0
        %335 = vmatprep.subr.mxu0 0.0
        %336 = vmatpush1.msra.mxu0 0.0
        %337 = vmatprep.subr.mxu0 0.0
        %338 = vmatpush1.msra.mxu0 0.0
        %339 = vmatprep.subr.mxu0 0.0
        %340 = vmatpush1.msra.mxu0 0.0
        %341 = vmatprep.subr.mxu0 0.0
        %342 = vmatpush1.msra.mxu0 0.0
        %343 = vmatprep.subr.mxu0 0.0
        %344 = vmatpush1.msra.mxu0 0.0
        %345 = vmatprep.subr.mxu0 0.0
        %346 = vmatpush1.msra.mxu0 0.0
        %347 = vmatprep.subr.mxu0 0.0
        %348 = vmatpush1.msra.mxu0 0.0
        %349 = vmatprep.subr.mxu0 0.0
        %350 = vmatpush1.msra.mxu0 0.0
        %351 = vmatprep.subr.mxu0 0.0
        %352 = vmatpush1.msra.mxu0 0.0
        %353 = vmatprep.subr.mxu0 0.0
        %354 = vmatpush1.msra.mxu0 0.0
        %355 = vmatprep.subr.mxu0 0.0
        %356 = vmatpush1.msra.mxu0 0.0
        %357 = vmatprep.subr.mxu0 0.0
        %358 = vmatpush1.msra.mxu0 0.0
        %359 = vmatprep.subr.mxu0 0.0
        %360 = vmatpush1.msra.mxu0 0.0
        %361 = vmatprep.subr.mxu0 0.0
        %362 = vmatpush1.msra.mxu0 0.0
        %363 = vmatprep.subr.mxu0 0.0
        %364 = vmatpush1.msra.mxu0 0.0
        %365 = vmatprep.subr.mxu0 0.0
        %366 = vmatpush1.msra.mxu0 0.0
        %367 = vmatprep.subr.mxu0 0.0
        %368 = vmatpush1.msra.mxu0 0.0
        %369 = vmatprep.subr.mxu0 0.0
        %370 = vmatpush1.msra.mxu0 0.0
        %371 = vmatprep.subr.mxu0 0.0
        %372 = vmatpush1.msra.mxu0 0.0
        %373 = vmatprep.subr.mxu0 0.0
        %374 = vmatpush1.msra.mxu0 0.0
        %375 = vmatprep.subr.mxu0 0.0
        %376 = vmatpush1.msra.mxu0 0.0
        %377 = vmatprep.subr.mxu0 0.0
        %378 = vmatpush1.msra.mxu0 0.0
        %379 = vmatprep.subr.mxu0 0.0
        %380 = vmatpush1.msra.mxu0 0.0
        %381 = vmatprep.mubr.f32.mxu0 0.0
        %v382 = vand.u32 %v304, 4294901760
        %v383 = vsub.f32 %v304, %v382
        %v384 = vand.u32 %v383, 4294901760
        %v385 = vsub.f32 %v383, %v384
        %v386 = vand.u32 %v385, 4294901760
        %387 = vmatmul.mubr.f32.gmra.mrb[0].mxu0 %v386
        %v388 = vpop.f32.mrb[0].mxu0
        %v389 = vadd.f32 %v300, %v388
        %v390 = vpop.f32.mrb[0].mxu0
        %391 = vmatprep.mubr.f32.mxu0 0.0
        %v392 = vand.u32 %v307, 4294901760
        %v393 = vsub.f32 %v307, %v392
        %v394 = vand.u32 %v393, 4294901760
        %v395 = vsub.f32 %v393, %v394
        %v396 = vand.u32 %v395, 4294901760
        %397 = vmatmul.mubr.f32.gmra.mrb[0].mxu0 %v396
        %v398 = vpop.f32.mrb[0].mxu0
        %v399 = vadd.f32 %v301, %v398
        %v400 = vpop.f32.mrb[0].mxu0
        %401 = vdwg.mxu0
        %402 = vmatprep.subr.mxu0 0.0
        %v403 = vand.u32 %v278, 4294901760
        %v404 = vsub.f32 %v278, %v403
        %v405 = vand.u32 %v404, 4294901760
        %v406 = vsub.f32 %v404, %v405
        %v407 = vand.u32 %v406, 4294901760
        %408 = vmatpush1.msra.mxu0 %v407
        %409 = vmatprep.subr.mxu0 0.0
        %v410 = vand.u32 %v279, 4294901760
        %v411 = vsub.f32 %v279, %v410
        %v412 = vand.u32 %v411, 4294901760
        %v413 = vsub.f32 %v411, %v412
        %v414 = vand.u32 %v413, 4294901760
        %415 = vmatpush1.msra.mxu0 %v414
        %416 = vmatprep.subr.mxu0 0.0
        %v417 = vand.u32 %v280, 4294901760
        %v418 = vsub.f32 %v280, %v417
        %v419 = vand.u32 %v418, 4294901760
        %v420 = vsub.f32 %v418, %v419
        %v421 = vand.u32 %v420, 4294901760
        %422 = vmatpush1.msra.mxu0 %v421
        %423 = vmatprep.subr.mxu0 0.0
        %v424 = vand.u32 %v281, 4294901760
        %v425 = vsub.f32 %v281, %v424
        %v426 = vand.u32 %v425, 4294901760
        %v427 = vsub.f32 %v425, %v426
        %v428 = vand.u32 %v427, 4294901760
        %429 = vmatpush1.msra.mxu0 %v428
        %430 = vmatprep.subr.mxu0 0.0
        %v431 = vand.u32 %v282, 4294901760
        %v432 = vsub.f32 %v282, %v431
        %v433 = vand.u32 %v432, 4294901760
        %v434 = vsub.f32 %v432, %v433
        %v435 = vand.u32 %v434, 4294901760
        %436 = vmatpush1.msra.mxu0 %v435
        %437 = vmatprep.subr.mxu0 0.0
        %v438 = vand.u32 %v283, 4294901760
        %v439 = vsub.f32 %v283, %v438
        %v440 = vand.u32 %v439, 4294901760
        %v441 = vsub.f32 %v439, %v440
        %v442 = vand.u32 %v441, 4294901760
        %443 = vmatpush1.msra.mxu0 %v442
        %444 = vmatprep.subr.mxu0 0.0
        %v445 = vand.u32 %v284, 4294901760
        %v446 = vsub.f32 %v284, %v445
        %v447 = vand.u32 %v446, 4294901760
        %v448 = vsub.f32 %v446, %v447
        %v449 = vand.u32 %v448, 4294901760
        %450 = vmatpush1.msra.mxu0 %v449
        %451 = vmatprep.subr.mxu0 0.0
        %v452 = vand.u32 %v285, 4294901760
        %v453 = vsub.f32 %v285, %v452
        %v454 = vand.u32 %v453, 4294901760
        %v455 = vsub.f32 %v453, %v454
        %v456 = vand.u32 %v455, 4294901760
        %457 = vmatpush1.msra.mxu0 %v456
        %458 = vmatprep.subr.mxu0 0.0
        %459 = vmatpush1.msra.mxu0 0.0
        %460 = vmatprep.subr.mxu0 0.0
        %461 = vmatpush1.msra.mxu0 0.0
        %462 = vmatprep.subr.mxu0 0.0
        %463 = vmatpush1.msra.mxu0 0.0
        %464 = vmatprep.subr.mxu0 0.0
        %465 = vmatpush1.msra.mxu0 0.0
        %466 = vmatprep.subr.mxu0 0.0
        %467 = vmatpush1.msra.mxu0 0.0
        %468 = vmatprep.subr.mxu0 0.0
        %469 = vmatpush1.msra.mxu0 0.0
        %470 = vmatprep.subr.mxu0 0.0
        %471 = vmatpush1.msra.mxu0 0.0
        %472 = vmatprep.subr.mxu0 0.0
        %473 = vmatpush1.msra.mxu0 0.0
        %474 = vmatprep.subr.mxu0 0.0
        %475 = vmatpush1.msra.mxu0 0.0
        %476 = vmatprep.subr.mxu0 0.0
        %477 = vmatpush1.msra.mxu0 0.0
        %478 = vmatprep.subr.mxu0 0.0
        %479 = vmatpush1.msra.mxu0 0.0
        %480 = vmatprep.subr.mxu0 0.0
        %481 = vmatpush1.msra.mxu0 0.0
        %482 = vmatprep.subr.mxu0 0.0
        %483 = vmatpush1.msra.mxu0 0.0
        %484 = vmatprep.subr.mxu0 0.0
        %485 = vmatpush1.msra.mxu0 0.0
        %486 = vmatprep.subr.mxu0 0.0
        %487 = vmatpush1.msra.mxu0 0.0
        %488 = vmatprep.subr.mxu0 0.0
        %489 = vmatpush1.msra.mxu0 0.0
        %490 = vmatprep.subr.mxu0 0.0
        %491 = vmatpush1.msra.mxu0 0.0
        %492 = vmatprep.subr.mxu0 0.0
        %493 = vmatpush1.msra.mxu0 0.0
        %494 = vmatprep.subr.mxu0 0.0
        %495 = vmatpush1.msra.mxu0 0.0
        %496 = vmatprep.subr.mxu0 0.0
        %497 = vmatpush1.msra.mxu0 0.0
        %498 = vmatprep.subr.mxu0 0.0
        %499 = vmatpush1.msra.mxu0 0.0
        %500 = vmatprep.subr.mxu0 0.0
        %501 = vmatpush1.msra.mxu0 0.0
        %502 = vmatprep.subr.mxu0 0.0
        %503 = vmatpush1.msra.mxu0 0.0
        %504 = vmatprep.subr.mxu0 0.0
        %505 = vmatpush1.msra.mxu0 0.0
        %506 = vmatprep.mubr.f32.mxu0 0.0
        %v507 = vand.u32 %v304, 4294901760
        %508 = vmatmul.mubr.f32.gmra.mrb[0].mxu0 %v507
        %v509 = vpop.f32.mrb[0].mxu0
        %v510 = vadd.f32 %v389, %v509
        %v511 = vpop.f32.mrb[0].mxu0
        %512 = vmatprep.mubr.f32.mxu0 0.0
        %v513 = vand.u32 %v307, 4294901760
        %514 = vmatmul.mubr.f32.gmra.mrb[0].mxu0 %v513
        %v515 = vpop.f32.mrb[0].mxu0
        %v516 = vadd.f32 %v399, %v515
        %v517 = vpop.f32.mrb[0].mxu0
        %518 = vdwg.mxu0
        %519 = vmatprep.subr.mxu0 0.0
        %v520 = vand.u32 %v278, 4294901760
        %v521 = vsub.f32 %v278, %v520
        %522 = vmatpush1.msra.mxu0 %v521
        %523 = vmatprep.subr.mxu0 0.0
        %v524 = vand.u32 %v279, 4294901760
        %v525 = vsub.f32 %v279, %v524
        %526 = vmatpush1.msra.mxu0 %v525
        %527 = vmatprep.subr.mxu0 0.0
        %v528 = vand.u32 %v280, 4294901760
        %v529 = vsub.f32 %v280, %v528
        %530 = vmatpush1.msra.mxu0 %v529
        %531 = vmatprep.subr.mxu0 0.0
        %v532 = vand.u32 %v281, 4294901760
        %v533 = vsub.f32 %v281, %v532
        %534 = vmatpush1.msra.mxu0 %v533
        %535 = vmatprep.subr.mxu0 0.0
        %v536 = vand.u32 %v282, 4294901760
        %v537 = vsub.f32 %v282, %v536
        %538 = vmatpush1.msra.mxu0 %v537
        %539 = vmatprep.subr.mxu0 0.0
        %v540 = vand.u32 %v283, 4294901760
        %v541 = vsub.f32 %v283, %v540
        %542 = vmatpush1.msra.mxu0 %v541
        %543 = vmatprep.subr.mxu0 0.0
        %v544 = vand.u32 %v284, 4294901760
        %v545 = vsub.f32 %v284, %v544
        %546 = vmatpush1.msra.mxu0 %v545
        %547 = vmatprep.subr.mxu0 0.0
        %v548 = vand.u32 %v285, 4294901760
        %v549 = vsub.f32 %v285, %v548
        %550 = vmatpush1.msra.mxu0 %v549
        %551 = vmatprep.subr.mxu0 0.0
        %552 = vmatpush1.msra.mxu0 0.0
        %553 = vmatprep.subr.mxu0 0.0
        %554 = vmatpush1.msra.mxu0 0.0
        %555 = vmatprep.subr.mxu0 0.0
        %556 = vmatpush1.msra.mxu0 0.0
        %557 = vmatprep.subr.mxu0 0.0
        %558 = vmatpush1.msra.mxu0 0.0
        %559 = vmatprep.subr.mxu0 0.0
        %560 = vmatpush1.msra.mxu0 0.0
        %561 = vmatprep.subr.mxu0 0.0
        %562 = vmatpush1.msra.mxu0 0.0
        %563 = vmatprep.subr.mxu0 0.0
        %564 = vmatpush1.msra.mxu0 0.0
        %565 = vmatprep.subr.mxu0 0.0
        %566 = vmatpush1.msra.mxu0 0.0
        %567 = vmatprep.subr.mxu0 0.0
        %568 = vmatpush1.msra.mxu0 0.0
        %569 = vmatprep.subr.mxu0 0.0
        %570 = vmatpush1.msra.mxu0 0.0
        %571 = vmatprep.subr.mxu0 0.0
        %572 = vmatpush1.msra.mxu0 0.0
        %573 = vmatprep.subr.mxu0 0.0
        %574 = vmatpush1.msra.mxu0 0.0
        %575 = vmatprep.subr.mxu0 0.0
        %576 = vmatpush1.msra.mxu0 0.0
        %577 = vmatprep.subr.mxu0 0.0
        %578 = vmatpush1.msra.mxu0 0.0
        %579 = vmatprep.subr.mxu0 0.0
        %580 = vmatpush1.msra.mxu0 0.0
        %581 = vmatprep.subr.mxu0 0.0
        %582 = vmatpush1.msra.mxu0 0.0
        %583 = vmatprep.subr.mxu0 0.0
        %584 = vmatpush1.msra.mxu0 0.0
        %585 = vmatprep.subr.mxu0 0.0
        %586 = vmatpush1.msra.mxu0 0.0
        %587 = vmatprep.subr.mxu0 0.0
        %588 = vmatpush1.msra.mxu0 0.0
        %589 = vmatprep.subr.mxu0 0.0
        %590 = vmatpush1.msra.mxu0 0.0
        %591 = vmatprep.subr.mxu0 0.0
        %592 = vmatpush1.msra.mxu0 0.0
        %593 = vmatprep.subr.mxu0 0.0
        %594 = vmatpush1.msra.mxu0 0.0
        %595 = vmatprep.subr.mxu0 0.0
        %596 = vmatpush1.msra.mxu0 0.0
        %597 = vmatprep.subr.mxu0 0.0
        %598 = vmatpush1.msra.mxu0 0.0
        %599 = vmatprep.mubr.f32.mxu0 0.0
        %v600 = vand.u32 %v304, 4294901760
        %v601 = vsub.f32 %v304, %v600
        %602 = vmatmul.mubr.f32.gmra.mrb[0].mxu0 %v601
        %v603 = vpop.f32.mrb[0].mxu0
        %v604 = vadd.f32 %v510, %v603
        %v605 = vpop.f32.mrb[0].mxu0
        %606 = vmatprep.mubr.f32.mxu0 0.0
        %v607 = vand.u32 %v307, 4294901760
        %v608 = vsub.f32 %v307, %v607
        %609 = vmatmul.mubr.f32.gmra.mrb[0].mxu0 %v608
        %v610 = vpop.f32.mrb[0].mxu0
        %v611 = vadd.f32 %v516, %v610
        %v612 = vpop.f32.mrb[0].mxu0
        %613 = vdwg.mxu0
        %614 = vmatprep.subr.mxu0 0.0
        %v615 = vand.u32 %v278, 4294901760
        %616 = vmatpush1.msra.mxu0 %v615
        %617 = vmatprep.subr.mxu0 0.0
        %v618 = vand.u32 %v279, 4294901760
        %619 = vmatpush1.msra.mxu0 %v618
        %620 = vmatprep.subr.mxu0 0.0
        %v621 = vand.u32 %v280, 4294901760
        %622 = vmatpush1.msra.mxu0 %v621
        %623 = vmatprep.subr.mxu0 0.0
        %v624 = vand.u32 %v281, 4294901760
        %625 = vmatpush1.msra.mxu0 %v624
        %626 = vmatprep.subr.mxu0 0.0
        %v627 = vand.u32 %v282, 4294901760
        %628 = vmatpush1.msra.mxu0 %v627
        %629 = vmatprep.subr.mxu0 0.0
        %v630 = vand.u32 %v283, 4294901760
        %631 = vmatpush1.msra.mxu0 %v630
        %632 = vmatprep.subr.mxu0 0.0
        %v633 = vand.u32 %v284, 4294901760
        %634 = vmatpush1.msra.mxu0 %v633
        %635 = vmatprep.subr.mxu0 0.0
        %v636 = vand.u32 %v285, 4294901760
        %637 = vmatpush1.msra.mxu0 %v636
        %638 = vmatprep.subr.mxu0 0.0
        %639 = vmatpush1.msra.mxu0 0.0
        %640 = vmatprep.subr.mxu0 0.0
        %641 = vmatpush1.msra.mxu0 0.0
        %642 = vmatprep.subr.mxu0 0.0
        %643 = vmatpush1.msra.mxu0 0.0
        %644 = vmatprep.subr.mxu0 0.0
        %645 = vmatpush1.msra.mxu0 0.0
        %646 = vmatprep.subr.mxu0 0.0
        %647 = vmatpush1.msra.mxu0 0.0
        %648 = vmatprep.subr.mxu0 0.0
        %649 = vmatpush1.msra.mxu0 0.0
        %650 = vmatprep.subr.mxu0 0.0
        %651 = vmatpush1.msra.mxu0 0.0
        %652 = vmatprep.subr.mxu0 0.0
        %653 = vmatpush1.msra.mxu0 0.0
        %654 = vmatprep.subr.mxu0 0.0
        %655 = vmatpush1.msra.mxu0 0.0
        %656 = vmatprep.subr.mxu0 0.0
        %657 = vmatpush1.msra.mxu0 0.0
        %658 = vmatprep.subr.mxu0 0.0
        %659 = vmatpush1.msra.mxu0 0.0
        %660 = vmatprep.subr.mxu0 0.0
        %661 = vmatpush1.msra.mxu0 0.0
        %662 = vmatprep.subr.mxu0 0.0
        %663 = vmatpush1.msra.mxu0 0.0
        %664 = vmatprep.subr.mxu0 0.0
        %665 = vmatpush1.msra.mxu0 0.0
        %666 = vmatprep.subr.mxu0 0.0
        %667 = vmatpush1.msra.mxu0 0.0
        %668 = vmatprep.subr.mxu0 0.0
        %669 = vmatpush1.msra.mxu0 0.0
        %670 = vmatprep.subr.mxu0 0.0
        %671 = vmatpush1.msra.mxu0 0.0
        %672 = vmatprep.subr.mxu0 0.0
        %673 = vmatpush1.msra.mxu0 0.0
        %674 = vmatprep.subr.mxu0 0.0
        %675 = vmatpush1.msra.mxu0 0.0
        %676 = vmatprep.subr.mxu0 0.0
        %677 = vmatpush1.msra.mxu0 0.0
        %678 = vmatprep.subr.mxu0 0.0
        %679 = vmatpush1.msra.mxu0 0.0
        %680 = vmatprep.subr.mxu0 0.0
        %681 = vmatpush1.msra.mxu0 0.0
        %682 = vmatprep.subr.mxu0 0.0
        %683 = vmatpush1.msra.mxu0 0.0
        %684 = vmatprep.subr.mxu0 0.0
        %685 = vmatpush1.msra.mxu0 0.0
        %686 = vmatprep.mubr.f32.mxu0 0.0
        %v687 = vand.u32 %v304, 4294901760
        %v688 = vsub.f32 %v304, %v687
        %v689 = vand.u32 %v688, 4294901760
        %690 = vmatmul.mubr.f32.gmra.mrb[0].mxu0 %v689
        %v691 = vpop.f32.mrb[0].mxu0
        %v692 = vadd.f32 %v604, %v691
        %v693 = vpop.f32.mrb[0].mxu0
        %694 = vmatprep.mubr.f32.mxu0 0.0
        %v695 = vand.u32 %v307, 4294901760
        %v696 = vsub.f32 %v307, %v695
        %v697 = vand.u32 %v696, 4294901760
        %698 = vmatmul.mubr.f32.gmra.mrb[0].mxu0 %v697
        %v699 = vpop.f32.mrb[0].mxu0
        %v700 = vadd.f32 %v611, %v699
        %v701 = vpop.f32.mrb[0].mxu0
        %702 = vdwg.mxu0
        %703 = vmatprep.subr.mxu0 0.0
        %v704 = vand.u32 %v278, 4294901760
        %v705 = vsub.f32 %v278, %v704
        %v706 = vand.u32 %v705, 4294901760
        %707 = vmatpush1.msra.mxu0 %v706
        %708 = vmatprep.subr.mxu0 0.0
        %v709 = vand.u32 %v279, 4294901760
        %v710 = vsub.f32 %v279, %v709
        %v711 = vand.u32 %v710, 4294901760
        %712 = vmatpush1.msra.mxu0 %v711
        %713 = vmatprep.subr.mxu0 0.0
        %v714 = vand.u32 %v280, 4294901760
        %v715 = vsub.f32 %v280, %v714
        %v716 = vand.u32 %v715, 4294901760
        %717 = vmatpush1.msra.mxu0 %v716
        %718 = vmatprep.subr.mxu0 0.0
        %v719 = vand.u32 %v281, 4294901760
        %v720 = vsub.f32 %v281, %v719
        %v721 = vand.u32 %v720, 4294901760
        %722 = vmatpush1.msra.mxu0 %v721
        %723 = vmatprep.subr.mxu0 0.0
        %v724 = vand.u32 %v282, 4294901760
        %v725 = vsub.f32 %v282, %v724
        %v726 = vand.u32 %v725, 4294901760
        %727 = vmatpush1.msra.mxu0 %v726
        %728 = vmatprep.subr.mxu0 0.0
        %v729 = vand.u32 %v283, 4294901760
        %v730 = vsub.f32 %v283, %v729
        %v731 = vand.u32 %v730, 4294901760
        %732 = vmatpush1.msra.mxu0 %v731
        %733 = vmatprep.subr.mxu0 0.0
        %v734 = vand.u32 %v284, 4294901760
        %v735 = vsub.f32 %v284, %v734
        %v736 = vand.u32 %v735, 4294901760
        %737 = vmatpush1.msra.mxu0 %v736
        %738 = vmatprep.subr.mxu0 0.0
        %v739 = vand.u32 %v285, 4294901760
        %v740 = vsub.f32 %v285, %v739
        %v741 = vand.u32 %v740, 4294901760
        %742 = vmatpush1.msra.mxu0 %v741
        %743 = vmatprep.subr.mxu0 0.0
        %744 = vmatpush1.msra.mxu0 0.0
        %745 = vmatprep.subr.mxu0 0.0
        %746 = vmatpush1.msra.mxu0 0.0
        %747 = vmatprep.subr.mxu0 0.0
        %748 = vmatpush1.msra.mxu0 0.0
        %749 = vmatprep.subr.mxu0 0.0
        %750 = vmatpush1.msra.mxu0 0.0
        %751 = vmatprep.subr.mxu0 0.0
        %752 = vmatpush1.msra.mxu0 0.0
        %753 = vmatprep.subr.mxu0 0.0
        %754 = vmatpush1.msra.mxu0 0.0
        %755 = vmatprep.subr.mxu0 0.0
        %756 = vmatpush1.msra.mxu0 0.0
        %757 = vmatprep.subr.mxu0 0.0
        %758 = vmatpush1.msra.mxu0 0.0
        %759 = vmatprep.subr.mxu0 0.0
        %760 = vmatpush1.msra.mxu0 0.0
        %761 = vmatprep.subr.mxu0 0.0
        %762 = vmatpush1.msra.mxu0 0.0
        %763 = vmatprep.subr.mxu0 0.0
        %764 = vmatpush1.msra.mxu0 0.0
        %765 = vmatprep.subr.mxu0 0.0
        %766 = vmatpush1.msra.mxu0 0.0
        %767 = vmatprep.subr.mxu0 0.0
        %768 = vmatpush1.msra.mxu0 0.0
        %769 = vmatprep.subr.mxu0 0.0
        %770 = vmatpush1.msra.mxu0 0.0
        %771 = vmatprep.subr.mxu0 0.0
        %772 = vmatpush1.msra.mxu0 0.0
        %773 = vmatprep.subr.mxu0 0.0
        %774 = vmatpush1.msra.mxu0 0.0
        %775 = vmatprep.subr.mxu0 0.0
        %776 = vmatpush1.msra.mxu0 0.0
        %777 = vmatprep.subr.mxu0 0.0
        %778 = vmatpush1.msra.mxu0 0.0
        %779 = vmatprep.subr.mxu0 0.0
        %780 = vmatpush1.msra.mxu0 0.0
        %781 = vmatprep.subr.mxu0 0.0
        %782 = vmatpush1.msra.mxu0 0.0
        %783 = vmatprep.subr.mxu0 0.0
        %784 = vmatpush1.msra.mxu0 0.0
        %785 = vmatprep.subr.mxu0 0.0
        %786 = vmatpush1.msra.mxu0 0.0
        %787 = vmatprep.subr.mxu0 0.0
        %788 = vmatpush1.msra.mxu0 0.0
        %789 = vmatprep.subr.mxu0 0.0
        %790 = vmatpush1.msra.mxu0 0.0
        %791 = vmatprep.mubr.f32.mxu0 0.0
        %v792 = vand.u32 %v304, 4294901760
        %793 = vmatmul.mubr.f32.gmra.mrb[0].mxu0 %v792
        %v794 = vpop.f32.mrb[0].mxu0
        %v795 = vadd.f32 %v692, %v794
        %v796 = vpop.f32.mrb[0].mxu0
        %797 = vmatprep.mubr.f32.mxu0 0.0
        %v798 = vand.u32 %v307, 4294901760
        %799 = vmatmul.mubr.f32.gmra.mrb[0].mxu0 %v798
        %v800 = vpop.f32.mrb[0].mxu0
        %v801 = vadd.f32 %v700, %v800
        %v802 = vpop.f32.mrb[0].mxu0
        %803 = vdwg.mxu0
        %804 = vmatprep.subr.mxu0 0.0
        %v805 = vand.u32 %v278, 4294901760
        %806 = vmatpush1.msra.mxu0 %v805
        %807 = vmatprep.subr.mxu0 0.0
        %v808 = vand.u32 %v279, 4294901760
        %809 = vmatpush1.msra.mxu0 %v808
        %810 = vmatprep.subr.mxu0 0.0
        %v811 = vand.u32 %v280, 4294901760
        %812 = vmatpush1.msra.mxu0 %v811
        %813 = vmatprep.subr.mxu0 0.0
        %v814 = vand.u32 %v281, 4294901760
        %815 = vmatpush1.msra.mxu0 %v814
        %816 = vmatprep.subr.mxu0 0.0
        %v817 = vand.u32 %v282, 4294901760
        %818 = vmatpush1.msra.mxu0 %v817
        %819 = vmatprep.subr.mxu0 0.0
        %v820 = vand.u32 %v283, 4294901760
        %821 = vmatpush1.msra.mxu0 %v820
        %822 = vmatprep.subr.mxu0 0.0
        %v823 = vand.u32 %v284, 4294901760
        %824 = vmatpush1.msra.mxu0 %v823
        %825 = vmatprep.subr.mxu0 0.0
        %v826 = vand.u32 %v285, 4294901760
        %827 = vmatpush1.msra.mxu0 %v826
        %828 = vmatprep.subr.mxu0 0.0
        %829 = vmatpush1.msra.mxu0 0.0
        %830 = vmatprep.subr.mxu0 0.0
        %831 = vmatpush1.msra.mxu0 0.0
        %832 = vmatprep.subr.mxu0 0.0
        %833 = vmatpush1.msra.mxu0 0.0
        %834 = vmatprep.subr.mxu0 0.0
        %835 = vmatpush1.msra.mxu0 0.0
        %836 = vmatprep.subr.mxu0 0.0
        %837 = vmatpush1.msra.mxu0 0.0
        %838 = vmatprep.subr.mxu0 0.0
        %839 = vmatpush1.msra.mxu0 0.0
        %840 = vmatprep.subr.mxu0 0.0
        %841 = vmatpush1.msra.mxu0 0.0
        %842 = vmatprep.subr.mxu0 0.0
        %843 = vmatpush1.msra.mxu0 0.0
        %844 = vmatprep.subr.mxu0 0.0
        %845 = vmatpush1.msra.mxu0 0.0
        %846 = vmatprep.subr.mxu0 0.0
        %847 = vmatpush1.msra.mxu0 0.0
        %848 = vmatprep.subr.mxu0 0.0
        %849 = vmatpush1.msra.mxu0 0.0
        %850 = vmatprep.subr.mxu0 0.0
        %851 = vmatpush1.msra.mxu0 0.0
        %852 = vmatprep.subr.mxu0 0.0
        %853 = vmatpush1.msra.mxu0 0.0
        %854 = vmatprep.subr.mxu0 0.0
        %855 = vmatpush1.msra.mxu0 0.0
        %856 = vmatprep.subr.mxu0 0.0
        %857 = vmatpush1.msra.mxu0 0.0
        %858 = vmatprep.subr.mxu0 0.0
        %859 = vmatpush1.msra.mxu0 0.0
        %860 = vmatprep.subr.mxu0 0.0
        %861 = vmatpush1.msra.mxu0 0.0
        %862 = vmatprep.subr.mxu0 0.0
        %863 = vmatpush1.msra.mxu0 0.0
        %864 = vmatprep.subr.mxu0 0.0
        %865 = vmatpush1.msra.mxu0 0.0
        %866 = vmatprep.subr.mxu0 0.0
        %867 = vmatpush1.msra.mxu0 0.0
        %868 = vmatprep.subr.mxu0 0.0
        %869 = vmatpush1.msra.mxu0 0.0
        %870 = vmatprep.subr.mxu0 0.0
        %871 = vmatpush1.msra.mxu0 0.0
        %872 = vmatprep.subr.mxu0 0.0
        %873 = vmatpush1.msra.mxu0 0.0
        %874 = vmatprep.subr.mxu0 0.0
        %875 = vmatpush1.msra.mxu0 0.0
        %876 = vmatprep.mubr.f32.mxu0 0.0
        %v877 = vand.u32 %v304, 4294901760
        %878 = vmatmul.mubr.f32.gmra.mrb[0].mxu0 %v877
        %v879 = vpop.f32.mrb[0].mxu0
        %v880 = vadd.f32 %v795, %v879
        %v881 = vpop.f32.mrb[0].mxu0
        %882 = vmatprep.mubr.f32.mxu0 0.0
        %v883 = vand.u32 %v307, 4294901760
        %884 = vmatmul.mubr.f32.gmra.mrb[0].mxu0 %v883
        %v885 = vpop.f32.mrb[0].mxu0
        %v886 = vadd.f32 %v801, %v885
        %v887 = vpop.f32.mrb[0].mxu0
        %888 = vdwg.mxu0
        %889 = vadd.xlane.f32.xlu0 %v880
        %v890 = vpop.xlane.xlu0 %889
        %vm891 = vcmask 1043456
        %v892 = vsel %vm891, %v886, 0.0
        %893 = vadd.xlane.f32.xlu0 %v892
        %v894 = vpop.xlane.xlu0 %893
        %v895 = vrcp.pop 128.0
        %v896 = vmul.f32 %v890, %v895
        %v897 = vmul.f32 %v894, %v895
        %v898 = vsub.f32 %v880, %v896
        %v899 = vsub.f32 %v886, %v897
        %v900 = vmul.f32 %v898, %v898
        %v901 = vmul.f32 %v899, %v899
        %902 = vadd.xlane.f32.xlu0 %v900
        %v903 = vpop.xlane.xlu0 %902
        %v904 = vsel %vm891, %v901, 0.0
        %905 = vadd.xlane.f32.xlu0 %v904
        %v906 = vpop.xlane.xlu0 %905
        %v907 = vmul.f32 %v903, %v895
        %v908 = vmul.f32 %v906, %v895
        %v909 = vadd.f32 %v907, 1e-12
        %v910 = vadd.f32 %v908, 1e-12
        %v911 = vrsqrt.pop %v909
        %v912 = vrsqrt.pop %v910
        %v913 = vmul.f32 %v898, %v911
        %v914 = vmul.f32 %v899, %v912
        %v915 = vld [vmem:[%s3] sm:$0x1]
        %v917 = vlaneseq
        %v918 = vshrl.u32 %v917, 7
        %v919 = vsub.s32 0, %v918
        %v920 = vrot.slane %v915, %v919
        %v922 = vmul.f32 %v913, %v920
        %v923 = vmul.f32 %v914, %v920
        %v924 = vld [vmem:[%s4] sm:$0x1]
        %v926 = vlaneseq
        %v927 = vshrl.u32 %v926, 7
        %v928 = vsub.s32 0, %v927
        %v929 = vrot.slane %v924, %v928
        %v931 = vadd.f32 %v922, %v929
        %v932 = vadd.f32 %v923, %v929
        %933 = vst [vmem:[%s258] sm:$0xff] %v931
        %934 = vst [vmem:[%s258 + $0x8] sm:$0xf] %v932
        %s935 = sand.u32 %s158, 1
        %s936 = scalar_lea.sflag [#allocation3], %s935
        %s937 = sand.u32 %s158, 1
        %s938 = smul.addr %s937, 16
        %s939 = scalar_lea.vmem [#allocation2], %s938
        // Predicated region
        $region41: #{sinusoidal_embedding_forward.1} parent=39 // pred_check
          %p940 = pneg %p168
        $region42: #{sinusoidal_embedding_forward.1} parent=39 // pred_check_branch
          %942 = sbr.rel (%p940) target = $region44
        $region43: #{sinusoidal_embedding_forward.1} parent=39 // pred_region
          %s943 = smul.u32 2, %s23
          %s945 = ssub.s32 256, 256
          %946 = vsyncadd %s936, %s945
          %s947 = smul.addr %s24, 2
          %s948 = sadd.s32 %s943, %s947
          %s949 = smul.addr %s948, 128
          %s950 = scalar_lea.hbm %s5, %s949
          %s951 = sshll.u32 %s939, 4
          %s952 = int_to_ptr.vmem [resolvable:$true] %s951
          %957 = dma.vmem_to_hbm [thread:$0]  %s952, 256, %s950, %s936, 128, 128, 8
        $region44: #{sinusoidal_embedding_forward.1} parent=39 // pred_fallthru
          _
      $region40: #{sinusoidal_embedding_forward.1} parent=5 // pred_fallthru
        _
      %p958 = scmp.le.s32.totalorder 2, %s14
      // Predicated region
      $region45: #{sinusoidal_embedding_forward.1} parent=5 // pred_check
        %p959 = pneg %p958
      $region46: #{sinusoidal_embedding_forward.1} parent=5 // pred_check_branch
        %961 = sbr.rel (%p959) target = $region48
      $region47: #{sinusoidal_embedding_forward.1} parent=5 // pred_region
        %s962 = ssub.s32 %s14, 2
        // Predicated region
        $region49: #{sinusoidal_embedding_forward.1} parent=47 // pred_check
          %p963 = pneg %p174
        $region50: #{sinusoidal_embedding_forward.1} parent=47 // pred_check_branch
          %965 = sbr.rel (%p963) target = $region52
        $region51: #{sinusoidal_embedding_forward.1} parent=47 // pred_region
          %s966 = sand.u32 %s159, 1
          %s967 = scalar_lea.sflag [#allocation3], %s966
          %s968 = sand.u32 %s159, 1
          %s969 = smul.addr %s968, 16
          %s970 = scalar_lea.vmem [#allocation2], %s969
          %971 = dma.done %s967, 256
        $region52: #{sinusoidal_embedding_forward.1} parent=47 // pred_fallthru
          _
      $region48: #{sinusoidal_embedding_forward.1} parent=5 // pred_fallthru
        _
    $region6: #{sinusoidal_embedding_forward.1} parent=1 // loop_footer
      %s18 = sadd.s32 1, %s14
    $region7: #{sinusoidal_embedding_forward.1} parent=1 // loop_footer_branch
      %13 = sbr.rel target = $region3
    $region8: #{sinusoidal_embedding_forward.1} parent=1 // loop_exit
      _
    %972 = vsyncpa [#allocation3], 1
    %s973 = scalar_lea.sflag [#allocation3], 1
    %974 = vsyncpa %s973, 1

</llo_original>
